<compile_context>
chip_gen: v6e
topology: v6e:2x2x1
jax: 0.10.0
libtpu: 0.0.40
codegen_flags: <defaults>
</compile_context>

<pallas_src>
import functools

import jax
import jax.numpy as jnp
from jax.experimental import pallas as pl
from jax.experimental.pallas import tpu as pltpu


def _focal_loss_kernel(logits_ref, target_ref, out_ref, *,
                       alpha, gamma, hw, t_lanes, nt_inner):
    oi = pl.program_id(1)          # spatial megacore split index
    ti = pl.program_id(2)          # HW-tile index within the split (reduction axis)

    @pl.when(ti == 0)
    def _():
        out_ref[...] = jnp.zeros_like(out_ref)

    x = logits_ref[...].astype(jnp.float32)                 # (C, T) lane-dense
    tgt = target_ref[...]                                    # (1, T) int32
    c = x.shape[0]

    # Validity mask for (possibly partial / fully logical-OOB) tiles.  Garbage
    # in padded lanes is harmless: every reduction below is per-lane (axis=0),
    # and the final select discards those lanes.
    tile = oi * nt_inner + ti
    lane = jax.lax.broadcasted_iota(jnp.int32, (1, t_lanes), 1)
    valid = (tile * t_lanes + lane) < hw                      # (1, T) bool

    # Numerically-stable log-sum-exp over classes (sublane axis), per lane.
    col_max = jnp.max(x, axis=0, keepdims=True)               # (1, T)
    shifted = x - col_max                                      # (C, T)
    lse = jnp.log(jnp.sum(jnp.exp(shifted), axis=0, keepdims=True))  # (1, T)

    # Target-class logit picked with a sublane-iota one-hot (no dynamic gather).
    class_ids = jax.lax.broadcasted_iota(jnp.int32, (c, t_lanes), 0)
    picked = jnp.sum(jnp.where(class_ids == tgt, shifted, 0.0),
                     axis=0, keepdims=True)                    # (1, T)

    ce = lse - picked                                          # (1, T)
    pt = jnp.exp(-ce)
    one_m_pt = 1.0 - pt
    if gamma == 2.0:            # default: multiply instead of pow (EUP-free)
        weight = one_m_pt * one_m_pt
    elif gamma == 1.0:
        weight = one_m_pt
    elif gamma == 0.0:
        weight = jnp.ones_like(one_m_pt)
    else:
        # Clamp: ce can round to a tiny negative -> one_m_pt slightly < 0 ->
        # pow(neg, fractional) would be NaN.
        weight = jnp.power(jnp.maximum(one_m_pt, 0.0), gamma)  # only on (1, T)
    focal = jnp.where(valid, alpha * weight * ce, 0.0)          # (1, T)

    # Lane-wise partial-sum accumulation into the resident output block.
    out_ref[...] += focal


def _vmem_budgets():
    """(resident-bytes budget, vmem_limit_bytes) — generation aware."""
    cap = None
    try:
        cap = getattr(pltpu.get_tpu_info(), "vmem_capacity_bytes", None)
    except Exception:
        cap = None
    if cap is None:
        cap = 64 * 1024 * 1024                    # assume smallest (v7x per-TC)
    if cap <= 64 * 1024 * 1024:                    # v7x: 64 MiB per TensorCore
        return 36 * 1024 * 1024, 48 * 1024 * 1024
    return 80 * 1024 * 1024, 100 * 1024 * 1024     # v5e / v6e: 128 MiB physical


def focal_loss(logits_nchw, target_nhw, *, alpha=0.25, gamma=2.0, reduction="mean"):
    """Focal loss over NCHW logits and NHW integer targets."""
    n, c, h, w = logits_nchw.shape
    hw = h * w

    # Free reshapes of contiguous NCHW / NHW arrays.
    logits = logits_nchw.reshape(n, c, hw)
    target = target_nhw.reshape(n, 1, hw)
    if target.dtype != jnp.int32:
        # TODO(synk): pass int32 targets at the API boundary to avoid this
        # extra full-HBM cast pass before the (bandwidth-bound) kernel.
        target = target.astype(jnp.int32)

    itemsize = jnp.dtype(logits.dtype).itemsize
    vmem_budget, vmem_limit = _vmem_budgets()

    # Per-lane resident-VMEM estimate:
    #   2 x (C*itemsize)  double-buffered logits block
    # + 4 x (C*4)         f32 temporaries (upcast, shifted, exp, one-hot select)
    # + ~12               target (dbl-buffered, int32) + resident f32 out row
    bytes_per_lane = c * (2 * itemsize + 16) + 12
    t_cap = max(128, (vmem_budget // bytes_per_lane) // 128 * 128)
    hw_padded = -(-hw // 128) * 128
    t_lanes = int(min(t_cap, 65536, hw_padded))     # no small cap: size by bytes
    num_t = int(pl.cdiv(hw, t_lanes))
    # TODO(synk): for very large C (>~512) chunk the class axis in-kernel
    # (running max / running sum-exp) instead of shrinking t_lanes.

    # Megacore: if the batch can't fill both v7x TensorCores, split the spatial
    # tile range into two "parallel" chunks, each with its own partial-sum row.
    n_split = 2 if (n == 1 and num_t >= 2) else 1
    nt_inner = int(pl.cdiv(num_t, n_split))

    def logits_map(ni, oi, ti):
        return (ni, 0, jnp.minimum(oi * nt_inner + ti, num_t - 1))

    def target_map(ni, oi, ti):
        return (ni, 0, jnp.minimum(oi * nt_inner + ti, num_t - 1))

    def out_map(ni, oi, ti):
        return (ni, oi, 0)

    kernel = functools.partial(
        _focal_loss_kernel,
        alpha=float(alpha), gamma=float(gamma),
        hw=int(hw), t_lanes=t_lanes, nt_inner=nt_inner)

    cost = pl.CostEstimate(
        flops=int(10 * n * c * hw),
        transcendentals=int(n * c * hw + 2 * n * hw),
        bytes_accessed=int(n * c * hw * itemsize + n * hw * 4
                           + n * n_split * t_lanes * 4),
    )

    partials = pl.pallas_call(
        kernel,
        out_shape=jax.ShapeDtypeStruct((n, n_split, t_lanes), jnp.float32),
        grid_spec=pltpu.PrefetchScalarGridSpec(
            num_scalar_prefetch=0,
            grid=(n, n_split, nt_inner),
            in_specs=[
                pl.BlockSpec((pl.Squeezed(), c, t_lanes), logits_map),
                pl.BlockSpec((pl.Squeezed(), 1, t_lanes), target_map),
            ],
            out_specs=pl.BlockSpec((pl.Squeezed(), 1, t_lanes), out_map),
        ),
        compiler_params=pltpu.CompilerParams(
            dimension_semantics=("parallel", "parallel", "arbitrary"),
            vmem_limit_bytes=int(vmem_limit)),
        cost_estimate=cost,
    )(logits, target)

    total = jnp.sum(partials)
    if reduction == "mean":
        return total / jnp.float32(n * hw)
    elif reduction == "sum":
        return total
    # TODO(synk): reduction='none' (per-element focal output) is not
    # implemented in this partial-sum kernel layout.
    raise NotImplementedError("reduction must be 'mean' or 'sum'")


def focal_loss_ref(logits_nchw, target_nhw, *, alpha=0.25, gamma=2.0):
    n, c, h, w = logits_nchw.shape
    logits = jnp.transpose(logits_nchw.reshape(n, c, h * w), (0, 2, 1)).reshape(-1, c)
    target = target_nhw.reshape(-1)
    logp = jax.nn.log_softmax(logits.astype(jnp.float32), axis=-1)
    ce = -jnp.take_along_axis(logp, target[:, None], axis=-1)[:, 0]
    pt = jnp.exp(-ce)
    return jnp.mean(alpha * (1.0 - pt) ** gamma * ce)


if __name__ == "__main__":
    key = jax.random.PRNGKey(0)
    k1, k2 = jax.random.split(key)

    N, C, H, W = 2, 4, 16, 16
    logits = jax.random.normal(k1, (N, C, H, W), dtype=jnp.float32)
    target = jax.random.randint(k2, (N, H, W), 0, C, dtype=jnp.int32)

    out = focal_loss(logits, target, alpha=0.25, gamma=2.0)
    out = jax.block_until_ready(out)

    ref = focal_loss_ref(logits, target, alpha=0.25, gamma=2.0)
    assert jnp.allclose(out, ref, rtol=1e-5, atol=1e-6), (out, ref)

    print("KERNEL_OK")
</pallas_src>

<mosaic_0001>
module attributes {stable_mosaic.version = 11 : i64} {
  func.func @_focal_loss_kernel(%arg0: i32, %arg1: i32, %arg2: i32, %arg3: memref<1x4x256xf32, #tpu.memory_space<vmem>>, %arg4: memref<1x1x256xi32, #tpu.memory_space<vmem>>, %arg5: memref<1x1x256xf32, #tpu.memory_space<vmem>>) attributes {dimension_semantics = [#tpu.dimension_semantics<parallel>, #tpu.dimension_semantics<parallel>, #tpu.dimension_semantics<arbitrary>], iteration_bounds = array<i64: 2, 1, 1>, scalar_prefetch = 0 : i64, scratch_operands = 0 : i64, tpu.core_type = #tpu.core_type<tc>, window_params = [{transform_indices = @transform_0, window_bounds = array<i64: 1, 4, 256>}, {transform_indices = @transform_1, window_bounds = array<i64: 1, 1, 256>}, {transform_indices = @transform_2, window_bounds = array<i64: 1, 1, 256>}]} {
    %c0_i32 = arith.constant 0 : i32
    %0 = arith.cmpi eq, %arg2, %c0_i32 : i32
    %1 = arith.extui %0 : i1 to i32
    %c0_i32_0 = arith.constant 0 : i32
    %2 = arith.cmpi ne, %1, %c0_i32_0 : i32
    scf.if %2 {
      %cst_20 = arith.constant 0.000000e+00 : f32
      %48 = vector.broadcast %cst_20 : f32 to vector<1x256xf32>
      %c0_21 = arith.constant 0 : index
      %c0_22 = arith.constant 0 : index
      %c0_23 = arith.constant 0 : index
      %49 = vector.load %arg5[%c0_21, %c0_22, %c0_23] : memref<1x1x256xf32, #tpu.memory_space<vmem>>, vector<1x1x256xf32>
      %50 = vector.shape_cast %49 : vector<1x1x256xf32> to vector<1x256xf32>
      %51 = vector.shape_cast %48 : vector<1x256xf32> to vector<1x1x256xf32>
      tpu.vector_store %arg5[%c0_21, %c0_22, %c0_23], %51 {strides = array<i32>} : memref<1x1x256xf32, #tpu.memory_space<vmem>>, vector<1x1x256xf32>,
    } else {
    }
    %c0 = arith.constant 0 : index
    %c0_1 = arith.constant 0 : index
    %c0_2 = arith.constant 0 : index
    %3 = vector.load %arg3[%c0, %c0_1, %c0_2] : memref<1x4x256xf32, #tpu.memory_space<vmem>>, vector<1x4x256xf32>
    %4 = vector.shape_cast %3 : vector<1x4x256xf32> to vector<4x256xf32>
    %c0_3 = arith.constant 0 : index
    %c0_4 = arith.constant 0 : index
    %c0_5 = arith.constant 0 : index
    %5 = vector.load %arg4[%c0_3, %c0_4, %c0_5] : memref<1x1x256xi32, #tpu.memory_space<vmem>>, vector<1x1x256xi32>
    %6 = vector.shape_cast %5 : vector<1x1x256xi32> to vector<1x256xi32>
    %c1_i32 = arith.constant 1 : i32
    %7 = arith.muli %arg1, %c1_i32 : i32
    %8 = arith.addi %7, %arg2 : i32
    %9 = tpu.iota {dimensions = array<i32: 1>} : vector<1x256xi32>
    %c256_i32 = arith.constant 256 : i32
    %10 = arith.muli %8, %c256_i32 : i32
    %11 = vector.broadcast %10 : i32 to vector<1x256xi32>
    %12 = arith.addi %11, %9 : vector<1x256xi32>
    %c256_i32_6 = arith.constant 256 : i32
    %13 = vector.broadcast %c256_i32_6 : i32 to vector<1x256xi32>
    %14 = arith.cmpi slt, %12, %13 : vector<1x256xi32>
    %cst = arith.constant dense<0xFF800000> : vector<256xf32>
    %15 = vector.multi_reduction <maximumf>, %4, %cst [0] : vector<4x256xf32> to vector<256xf32>
    %16 = vector.shape_cast %15 : vector<256xf32> to vector<1x256xf32>
    %17 = vector.broadcast %16 : vector<1x256xf32> to vector<4x256xf32>
    %18 = arith.subf %4, %17 : vector<4x256xf32>
    %19 = math.exp %18 : vector<4x256xf32>
    %cst_7 = arith.constant dense<0.000000e+00> : vector<256xf32>
    %20 = vector.multi_reduction <add>, %19, %cst_7 [0] : vector<4x256xf32> to vector<256xf32>
    %21 = vector.shape_cast %20 : vector<256xf32> to vector<1x256xf32>
    %22 = math.log %21 : vector<1x256xf32>
    %23 = tpu.iota {dimensions = array<i32: 0>} : vector<4x256xi32>
    %24 = vector.broadcast %6 : vector<1x256xi32> to vector<4x256xi32>
    %25 = arith.cmpi eq, %23, %24 : vector<4x256xi32>
    %cst_8 = arith.constant 0.000000e+00 : f32
    %26 = vector.broadcast %cst_8 : f32 to vector<4x256xf32>
    %27 = arith.select %25, %18, %26 : vector<4x256xi1>, vector<4x256xf32>
    %cst_9 = arith.constant dense<0.000000e+00> : vector<256xf32>
    %28 = vector.multi_reduction <add>, %27, %cst_9 [0] : vector<4x256xf32> to vector<256xf32>
    %29 = vector.shape_cast %28 : vector<256xf32> to vector<1x256xf32>
    %30 = arith.subf %22, %29 : vector<1x256xf32>
    %cst_10 = arith.constant 0.000000e+00 : f32
    %31 = vector.broadcast %cst_10 : f32 to vector<1x256xf32>
    %32 = arith.subf %31, %30 : vector<1x256xf32>
    %33 = math.exp %32 : vector<1x256xf32>
    %cst_11 = arith.constant 1.000000e+00 : f32
    %34 = vector.broadcast %cst_11 : f32 to vector<1x256xf32>
    %35 = arith.subf %34, %33 : vector<1x256xf32>
    %36 = arith.mulf %35, %35 : vector<1x256xf32>
    %cst_12 = arith.constant 2.500000e-01 : f32
    %37 = vector.broadcast %cst_12 : f32 to vector<1x256xf32>
    %38 = arith.mulf %37, %36 : vector<1x256xf32>
    %39 = arith.mulf %38, %30 : vector<1x256xf32>
    %cst_13 = arith.constant 0.000000e+00 : f32
    %40 = vector.broadcast %cst_13 : f32 to vector<1x256xf32>
    %41 = arith.select %14, %39, %40 : vector<1x256xi1>, vector<1x256xf32>
    %c0_14 = arith.constant 0 : index
    %c0_15 = arith.constant 0 : index
    %c0_16 = arith.constant 0 : index
    %42 = vector.load %arg5[%c0_14, %c0_15, %c0_16] : memref<1x1x256xf32, #tpu.memory_space<vmem>>, vector<1x1x256xf32>
    %43 = vector.shape_cast %42 : vector<1x1x256xf32> to vector<1x256xf32>
    %44 = arith.addf %43, %41 : vector<1x256xf32>
    %c0_17 = arith.constant 0 : index
    %c0_18 = arith.constant 0 : index
    %c0_19 = arith.constant 0 : index
    %45 = vector.load %arg5[%c0_17, %c0_18, %c0_19] : memref<1x1x256xf32, #tpu.memory_space<vmem>>, vector<1x1x256xf32>
    %46 = vector.shape_cast %45 : vector<1x1x256xf32> to vector<1x256xf32>
    %47 = vector.shape_cast %44 : vector<1x256xf32> to vector<1x1x256xf32>
    tpu.vector_store %arg5[%c0_17, %c0_18, %c0_19], %47 {strides = array<i32>} : memref<1x1x256xf32, #tpu.memory_space<vmem>>, vector<1x1x256xf32>,
    return
  }
  func.func @transform_0(%arg0: i32, %arg1: i32, %arg2: i32) -> (i32, i32, i32) {
    %c1_i32 = arith.constant 1 : i32
    %0 = arith.muli %arg1, %c1_i32 : i32
    %1 = arith.addi %0, %arg2 : i32
    %c0_i32 = arith.constant 0 : i32
    %2 = arith.minsi %1, %c0_i32 : i32
    %c0_i32_0 = arith.constant 0 : i32
    %c0_i32_1 = arith.constant 0 : i32
    return %arg0, %c0_i32_0, %2 : i32, i32, i32
  }
  func.func @transform_1(%arg0: i32, %arg1: i32, %arg2: i32) -> (i32, i32, i32) {
    %c1_i32 = arith.constant 1 : i32
    %0 = arith.muli %arg1, %c1_i32 : i32
    %1 = arith.addi %0, %arg2 : i32
    %c0_i32 = arith.constant 0 : i32
    %2 = arith.minsi %1, %c0_i32 : i32
    %c0_i32_0 = arith.constant 0 : i32
    %c0_i32_1 = arith.constant 0 : i32
    return %arg0, %c0_i32_0, %2 : i32, i32, i32
  }
  func.func @transform_2(%arg0: i32, %arg1: i32, %arg2: i32) -> (i32, i32, i32) {
    %c0_i32 = arith.constant 0 : i32
    %c0_i32_0 = arith.constant 0 : i32
    return %arg0, %arg1, %c0_i32 : i32, i32, i32
  }
}

</mosaic_0001>

<llo_original>
// kernel: tpu_custom_call.1
$region0: #{tpu_custom_call.1}
  #allocation0 [shape = 'u32[]', space=smem, size = 0x4, offset = 0x4, fixed_abs, tag = 'smem constant byte address 0x4 - core index']
  #allocation1 [shape = 'u32[144,128]{1,0:T(1,128)}', space=vmem, size = 0x12000, scoped, tag = 'internal scratch']
  %s0 = inlined_call_operand.hbm [shape: f32[2,4,256], index: 0, kind: input, shape index: {}]
  %s1 = inlined_call_operand.hbm [shape: s32[2,1,256], index: 1, kind: input, shape index: {}]
  %s2 = inlined_call_operand.hbm [shape: f32[2,1,256], index: 2, kind: output, shape index: {}]
  %s3 = sld [smem:[#allocation0]]
  $region53: #{tpu_custom_call.1} parent=0
    _
  %s5 = ssub.s32 1, %s3
  %s6 = scalar_select 0, %s5, %s3
  $region1: #{tpu_custom_call.1} parent=0
    #allocation2 [shape = 'u8[8192]{0}', space=vmem, size = 0x2000, scoped, tag = 'input window, operand 0']
    #allocation3 [shape = 's32[2]{0}', space=sflag, size = 0x8, scoped, tag = 'scoped memory for tpu_custom_call.1']
    #allocation4 [shape = 's32[2]{0}', space=sflag, size = 0x8, scoped, tag = 'scoped memory for tpu_custom_call.1']
    #allocation5 [shape = 'u8[2048]{0}', space=vmem, size = 0x800, scoped, tag = 'input window, operand 1']
    #allocation6 [shape = 's32[2]{0}', space=sflag, size = 0x8, scoped, tag = 'scoped memory for tpu_custom_call.1']
    #allocation7 [shape = 'u8[2048]{0}', space=vmem, size = 0x800, scoped, tag = 'output window, operand 0']
    %7 = vsyncpa [#allocation3], 0
    %s8 = scalar_lea.sflag [#allocation3], 1
    %9 = vsyncpa %s8, 0
    %10 = vsyncpa [#allocation6], 0
    %s11 = scalar_lea.sflag [#allocation6], 1
    %12 = vsyncpa %s11, 0
    %13 = vsyncpa [#allocation4], 0
    %s14 = scalar_lea.sflag [#allocation4], 1
    %15 = vsyncpa %s14, 0
    loop: start=0, step=1, limit=4
    $region2: #{tpu_custom_call.1} parent=1 // loop_pre_header
      _
    $region3: #{tpu_custom_call.1} parent=1 // loop_header
      %s17 = sphi 0, %s21
      %p18 = scmp.ge.s32.totalorder %s17, 4
      %s24 = sphi 0, %s43
      %s25 = sphi 0, %s39
      %s26 = sphi 0, %s35
      %s27 = sphi 0, %s24
      %s28 = sphi 0, %s25
      %s29 = sphi 0, %s26
      %s30 = sphi 0, %s27
      %s31 = sphi 0, %s28
      %s32 = sphi 0, %s29
      %s54 = sphi 0, %s56
      %s57 = sphi 0, %s54
      %s58 = sphi 0, %s57
      %s74 = sphi 0, %s58
      %s88 = sphi 0, %s90
      %s91 = sphi 0, %s88
      %s92 = sphi 0, %s91
      %s108 = sphi 0, %s92
      %s116 = sphi 0, %s118
      %s119 = sphi 0, %s116
      %s120 = sphi 0, %s119
      %s136 = sphi 0, %s120
    $region4: #{tpu_custom_call.1} parent=1 // loop_header_branch
      %20 = sbr.rel (%p18) target = $region8
    $region5: #{tpu_custom_call.1} parent=1 // loop_body
      %s22 = ssub.s32 %s17, 1
      %s23 = ssub.s32 %s17, 2
      %s33 = sadd.s32 1, %s26
      %p34 = scmp.ge.s32.totalorder %s33, 1
      %s35 = scalar_select %p34, 0, %s33
      %s36 = sadd.s32 1, %s25
      %s37 = scalar_select %p34, %s36, %s25
      %p38 = scmp.ge.s32.totalorder %s37, 1
      %s39 = scalar_select %p38, 0, %s37
      %s40 = sadd.s32 1, %s24
      %s41 = scalar_select %p38, %s40, %s24
      %p42 = scmp.ge.s32.totalorder %s41, 2
      %s43 = scalar_select %p42, 0, %s41
      %s44 = sadd.s32 %s25, %s26
      %p45 = scmp.lt.s32.totalorder %s44, 0
      %s46 = scalar_select %p45, %s44, 0
      %s47 = sadd.s32 %s39, %s35
      %p48 = scmp.lt.s32.totalorder %s47, 0
      %s49 = scalar_select %p48, %s47, 0
      %s50 = ssub.s32 %s24, %s43
      %s51 = ssub.s32 %s46, %s49
      %s52 = sor.u32 %s50, %s51
      %p53 = scmp.eq.s32.totalorder %s52, 0
      %s55 = sadd.s32 %s54, 1
      %s56 = scalar_select %p53, %s54, %s55
      %p59 = pneg %p53
      %p60 = scmp.eq.s32.totalorder %s17, 1
      %p61 = por %p59, %p60
      %p62 = scmp.ne.s32.totalorder %s54, %s57
      %p63 = scmp.eq.s32.totalorder %s17, 0
      %p64 = por %p62, %p63
      %p65 = scmp.ne.s32.totalorder %s54, %s57
      %p66 = scmp.eq.s32.totalorder %s22, 1
      %p67 = por %p65, %p66
      %p68 = scmp.ne.s32.totalorder %s57, %s58
      %p69 = scmp.eq.s32.totalorder %s22, 0
      %p70 = por %p68, %p69
      %p71 = scmp.ne.s32.totalorder %s57, %s58
      %p72 = scmp.eq.s32.totalorder %s23, 1
      %p73 = por %p71, %p72
      %p75 = scmp.ne.s32.totalorder %s58, %s74
      %p76 = scmp.eq.s32.totalorder %s23, 0
      %p77 = por %p75, %p76
      %s78 = sadd.s32 %s25, %s26
      %p79 = scmp.lt.s32.totalorder %s78, 0
      %s80 = scalar_select %p79, %s78, 0
      %s81 = sadd.s32 %s39, %s35
      %p82 = scmp.lt.s32.totalorder %s81, 0
      %s83 = scalar_select %p82, %s81, 0
      %s84 = ssub.s32 %s24, %s43
      %s85 = ssub.s32 %s80, %s83
      %s86 = sor.u32 %s84, %s85
      %p87 = scmp.eq.s32.totalorder %s86, 0
      %s89 = sadd.s32 %s88, 1
      %s90 = scalar_select %p87, %s88, %s89
      %p93 = pneg %p87
      %p94 = scmp.eq.s32.totalorder %s17, 1
      %p95 = por %p93, %p94
      %p96 = scmp.ne.s32.totalorder %s88, %s91
      %p97 = scmp.eq.s32.totalorder %s17, 0
      %p98 = por %p96, %p97
      %p99 = scmp.ne.s32.totalorder %s88, %s91
      %p100 = scmp.eq.s32.totalorder %s22, 1
      %p101 = por %p99, %p100
      %p102 = scmp.ne.s32.totalorder %s91, %s92
      %p103 = scmp.eq.s32.totalorder %s22, 0
      %p104 = por %p102, %p103
      %p105 = scmp.ne.s32.totalorder %s91, %s92
      %p106 = scmp.eq.s32.totalorder %s23, 1
      %p107 = por %p105, %p106
      %p109 = scmp.ne.s32.totalorder %s92, %s108
      %p110 = scmp.eq.s32.totalorder %s23, 0
      %p111 = por %p109, %p110
      %s112 = ssub.s32 %s24, %s43
      %s113 = ssub.s32 %s25, %s39
      %s114 = sor.u32 %s112, %s113
      %p115 = scmp.eq.s32.totalorder %s114, 0
      %s117 = sadd.s32 %s116, 1
      %s118 = scalar_select %p115, %s116, %s117
      %p121 = pneg %p115
      %p122 = scmp.eq.s32.totalorder %s17, 1
      %p123 = por %p121, %p122
      %p124 = scmp.ne.s32.totalorder %s116, %s119
      %p125 = scmp.eq.s32.totalorder %s17, 0
      %p126 = por %p124, %p125
      %p127 = scmp.ne.s32.totalorder %s116, %s119
      %p128 = scmp.eq.s32.totalorder %s22, 1
      %p129 = por %p127, %p128
      %p130 = scmp.ne.s32.totalorder %s119, %s120
      %p131 = scmp.eq.s32.totalorder %s22, 0
      %p132 = por %p130, %p131
      %p133 = scmp.ne.s32.totalorder %s119, %s120
      %p134 = scmp.eq.s32.totalorder %s23, 1
      %p135 = por %p133, %p134
      %p137 = scmp.ne.s32.totalorder %s120, %s136
      %p138 = scmp.eq.s32.totalorder %s23, 0
      %p139 = por %p137, %p138
      %p140 = scmp.le.s32.totalorder 1, %s17
      %p141 = scmp.lt.s32.totalorder %s17, 3
      %p142 = pnand %p140, %p141
      %p143 = pneg %p142
      // Predicated region
      $region9: #{tpu_custom_call.1} parent=5 // pred_check
        _
      $region10: #{tpu_custom_call.1} parent=5 // pred_check_branch
        %145 = sbr.rel (%p142) target = $region12
      $region11: #{tpu_custom_call.1} parent=5 // pred_region
        %s146 = ssub.s32 %s17, 1
      $region12: #{tpu_custom_call.1} parent=5 // pred_fallthru
        _
      %p147 = scmp.lt.s32.totalorder %s17, 2
      // Predicated region
      $region13: #{tpu_custom_call.1} parent=5 // pred_check
        %p148 = pneg %p147
      $region14: #{tpu_custom_call.1} parent=5 // pred_check_branch
        %150 = sbr.rel (%p148) target = $region16
      $region15: #{tpu_custom_call.1} parent=5 // pred_region
        // Predicated region
        $region17: #{tpu_custom_call.1} parent=15 // pred_check
          %p151 = pneg %p64
        $region18: #{tpu_custom_call.1} parent=15 // pred_check_branch
          %153 = sbr.rel (%p151) target = $region20
        $region19: #{tpu_custom_call.1} parent=15 // pred_region
          %s154 = sand.u32 %s54, 1
          %s155 = scalar_lea.sflag [#allocation3], %s154
          %s156 = sand.u32 %s54, 1
          %s157 = smul.addr %s156, 8
          %s158 = scalar_lea.vmem [#allocation2], %s157
          %s159 = sadd.s32 %s25, %s26
          %p160 = scmp.lt.s32.totalorder %s159, 0
          %s161 = scalar_select %p160, %s159, 0
          %s162 = smul.u32 2, %s161
          %s164 = ssub.s32 128, 128
          %165 = vsyncadd %s155, %s164
          %s166 = smul.addr %s24, 2
          %s167 = sadd.s32 %s162, %s166
          %s168 = smul.addr %s167, 64
          %s169 = scalar_lea.hbm %s0, %s168
          %s171 = sshll.u32 %s158, 4
          %s172 = int_to_ptr.vmem [resolvable:$true] %s171
          %174 = dma.hbm_to_vmem [thread:$0]  %s169, 128, %s172, %s155
        $region20: #{tpu_custom_call.1} parent=15 // pred_fallthru
          _
        // Predicated region
        $region21: #{tpu_custom_call.1} parent=15 // pred_check
          %p175 = pneg %p98
        $region22: #{tpu_custom_call.1} parent=15 // pred_check_branch
          %177 = sbr.rel (%p175) target = $region24
        $region23: #{tpu_custom_call.1} parent=15 // pred_region
          %s178 = sand.u32 %s88, 1
          %s179 = scalar_lea.sflag [#allocation6], %s178
          %s180 = sand.u32 %s88, 1
          %s181 = smul.addr %s180, 2
          %s182 = scalar_lea.vmem [#allocation5], %s181
          %s183 = sadd.s32 %s25, %s26
          %p184 = scmp.lt.s32.totalorder %s183, 0
          %s185 = scalar_select %p184, %s183, 0
          %s186 = smul.u32 2, %s185
          %s188 = ssub.s32 32, 32
          %189 = vsyncadd %s179, %s188
          %s190 = smul.addr %s24, 2
          %s191 = sadd.s32 %s186, %s190
          %s192 = smul.addr %s191, 16
          %s193 = scalar_lea.hbm %s1, %s192
          %s195 = sshll.u32 %s182, 4
          %s196 = int_to_ptr.vmem [resolvable:$true] %s195
          %198 = dma.hbm_to_vmem [thread:$0]  %s193, 32, %s196, %s179
        $region24: #{tpu_custom_call.1} parent=15 // pred_fallthru
          _
      $region16: #{tpu_custom_call.1} parent=5 // pred_fallthru
        _
      %p199 = scmp.le.s32.totalorder 1, %s17
      %p200 = scmp.lt.s32.totalorder %s17, 3
      %p201 = pnand %p199, %p200
      %p202 = pneg %p201
      // Predicated region
      $region25: #{tpu_custom_call.1} parent=5 // pred_check
        _
      $region26: #{tpu_custom_call.1} parent=5 // pred_check_branch
        %204 = sbr.rel (%p201) target = $region28
      $region27: #{tpu_custom_call.1} parent=5 // pred_region
        %s205 = ssub.s32 %s17, 1
        %s206 = sand.u32 %s57, 1
        %s207 = scalar_lea.sflag [#allocation3], %s206
        %s208 = sand.u32 %s57, 1
        %s209 = smul.addr %s208, 8
        %s210 = scalar_lea.vmem [#allocation2], %s209
        // Predicated region
        $region29: #{tpu_custom_call.1} parent=27 // pred_check
          %p211 = pneg %p70
        $region30: #{tpu_custom_call.1} parent=27 // pred_check_branch
          %213 = sbr.rel (%p211) target = $region32
        $region31: #{tpu_custom_call.1} parent=27 // pred_region
          %214 = dma.done %s207, 128
        $region32: #{tpu_custom_call.1} parent=27 // pred_fallthru
          _
        %s215 = sand.u32 %s91, 1
        %s216 = scalar_lea.sflag [#allocation6], %s215
        %s217 = sand.u32 %s91, 1
        %s218 = smul.addr %s217, 2
        %s219 = scalar_lea.vmem [#allocation5], %s218
        // Predicated region
        $region33: #{tpu_custom_call.1} parent=27 // pred_check
          %p220 = pneg %p104
        $region34: #{tpu_custom_call.1} parent=27 // pred_check_branch
          %222 = sbr.rel (%p220) target = $region36
        $region35: #{tpu_custom_call.1} parent=27 // pred_region
          %223 = dma.done %s216, 32
        $region36: #{tpu_custom_call.1} parent=27 // pred_fallthru
          _
        %s224 = sand.u32 %s57, 1
        %s225 = scalar_lea.sflag [#allocation3], %s224
        %s226 = sand.u32 %s57, 1
        %s227 = smul.addr %s226, 8
        %s228 = scalar_lea.vmem [#allocation2], %s227
        %p229 = pneg %p70
        %p230 = pneg %p67
        %s231 = sand.u32 %s91, 1
        %s232 = scalar_lea.sflag [#allocation6], %s231
        %s233 = sand.u32 %s91, 1
        %s234 = smul.addr %s233, 2
        %s235 = scalar_lea.vmem [#allocation5], %s234
        %p236 = pneg %p104
        %p237 = pneg %p101
        %p238 = pneg %p132
        %p239 = pneg %p129
        %s240 = sand.u32 %s119, 1
        %s241 = scalar_lea.sflag [#allocation4], %s240
        %s242 = sand.u32 %s119, 1
        %s243 = smul.addr %s242, 2
        %s244 = scalar_lea.vmem [#allocation7], %s243
        %s245 = sadd.s32 %s28, %s29
        %p246 = scmp.lt.s32.totalorder %s245, 0
        %s247 = scalar_select %p246, %s245, 0
        %s248 = smul.u32 2, %s247
        %s249 = sadd.s32 %s28, %s29
        %p250 = scmp.lt.s32.totalorder %s249, 0
        %s251 = scalar_select %p250, %s249, 0
        %s252 = smul.u32 2, %s251
        %p253 = scmp.eq.s32.totalorder %s29, 0
        // Predicated region
        $region37: #{tpu_custom_call.1} parent=27 // pred_check
          %p254 = pneg %p253
        $region38: #{tpu_custom_call.1} parent=27 // pred_check_branch
          %256 = sbr.rel (%p254) target = $region40
        $region39: #{tpu_custom_call.1} parent=27 // pred_region
          %v257 = vlaneseq
          %vm258 = vcmp.ge.s32.totalorder %v257, 0
          %vm259 = vcmp.lt.s32.totalorder %v257, 256
          %vm260 = vmand %vm258, %vm259
          %261 = vst.msk [vmem:[%s244] sm:$0x3] %vm260, 0.0
        $region40: #{tpu_custom_call.1} parent=27 // pred_fallthru
          _
        %v262 = vld [vmem:[%s210] sm:$0xff]
        %v263 = vld [vmem:[%s219] sm:$0x3]
        %s264 = sadd.s32 %s28, %s29
        %v265 = vlaneseq
        %v266 = vand.u32 %v265, 127
        %v267 = vadd.s32 %v266, 128
        %s268 = smul.u32 %s264, 256
        %v269 = vstv %s268
        %v270 = vadd.s32 %v269, %v266
        %v271 = vadd.s32 %v269, %v267
        %vm272 = vcmp.lt.s32.totalorder %v270, 256
        %vm273 = vcmp.lt.s32.totalorder %v271, 256
        %v275 = vcombine.high %v262, %v262
        %vm277 = vcmask 1043456
        %v278 = vsel %vm277, %v262, -inf
        %v279 = vrot.slane %v278, 4
        %v280 = vmax.f32 %v278, %v279
        %v281 = vrot.slane %v280, 2
        %v282 = vmax.f32 %v280, %v281
        %v283 = vrot.slane %v282, 1
        %v284 = vmax.f32 %v282, %v283
        %v285 = vsel %vm277, %v275, -inf
        %v286 = vrot.slane %v285, 4
        %v287 = vmax.f32 %v285, %v286
        %v288 = vrot.slane %v287, 2
        %v289 = vmax.f32 %v287, %v288
        %v290 = vrot.slane %v289, 1
        %v291 = vmax.f32 %v289, %v290
        %v294 = vcombine.low %v284, %v291
        %v296 = vsub.f32 %v262, %v294
        %v297 = vmul.f32 %v296, 1.442695
        %v298 = vpow.pop %v297
        %v300 = vcombine.high %v298, %v298
        %v302 = vsel %vm277, %v298, 0.0
        %v303 = vrot.slane %v302, 4
        %v304 = vadd.f32 %v302, %v303
        %v305 = vrot.slane %v304, 2
        %v306 = vadd.f32 %v304, %v305
        %v307 = vrot.slane %v306, 1
        %v308 = vadd.f32 %v306, %v307
        %v309 = vsel %vm277, %v300, 0.0
        %v310 = vrot.slane %v309, 4
        %v311 = vadd.f32 %v309, %v310
        %v312 = vrot.slane %v311, 2
        %v313 = vadd.f32 %v311, %v312
        %v314 = vrot.slane %v313, 1
        %v315 = vadd.f32 %v313, %v314
        %v316 = vlog2.pop %v308
        %v317 = vmul.f32 %v316, 0.6931472
        %v318 = vlog2.pop %v315
        %v319 = vmul.f32 %v318, 0.6931472
        %v320 = vlaneseq
        %v321 = vshrl.u32 %v320, 7
        %v322 = vlaneseq
        %v323 = vshrl.u32 %v322, 7
        %v324 = vsub.s32 0, %v323
        %v325 = vrot.slane %v263, %v324
        %v326 = vlaneseq
        %v327 = vshrl.u32 %v326, 7
        %v328 = vsub.s32 1, %v327
        %v329 = vrot.slane %v263, %v328
        %vm330 = vcmp.eq.s32.totalorder %v321, %v325
        %vm331 = vcmp.eq.s32.totalorder %v321, %v329
        %v333 = vcombine.high %v296, %v296
        %v335 = vsel %vm330, %v296, 0.0
        %v336 = vsel %vm331, %v333, 0.0
        %v337 = vsel %vm277, %v335, 0.0
        %v338 = vrot.slane %v337, 4
        %v339 = vadd.f32 %v337, %v338
        %v340 = vrot.slane %v339, 2
        %v341 = vadd.f32 %v339, %v340
        %v342 = vrot.slane %v341, 1
        %v343 = vadd.f32 %v341, %v342
        %v344 = vsel %vm277, %v336, 0.0
        %v345 = vrot.slane %v344, 4
        %v346 = vadd.f32 %v344, %v345
        %v347 = vrot.slane %v346, 2
        %v348 = vadd.f32 %v346, %v347
        %v349 = vrot.slane %v348, 1
        %v350 = vadd.f32 %v348, %v349
        %v351 = vsub.f32 %v317, %v343
        %v352 = vsub.f32 %v319, %v350
        %v353 = vsub.f32 0.0, %v351
        %v354 = vsub.f32 0.0, %v352
        %v355 = vmul.f32 %v353, 1.442695
        %v356 = vpow.pop %v355
        %v357 = vmul.f32 %v354, 1.442695
        %v358 = vpow.pop %v357
        %v359 = vsub.f32 1.0, %v356
        %v360 = vsub.f32 1.0, %v358
        %v361 = vmul.f32 %v359, %v359
        %v362 = vmul.f32 %v360, %v360
        %v363 = vmul.f32 %v361, 0.25
        %v364 = vmul.f32 %v362, 0.25
        %v365 = vmul.f32 %v363, %v351
        %v366 = vmul.f32 %v364, %v352
        %v367 = vsel %vm272, %v365, 0.0
        %v368 = vsel %vm273, %v366, 0.0
        %v369 = vld [vmem:[%s244] sm:$0x3]
        %v372 = vcombine.low %v367, %v368
        %v374 = vunpack.c.l.s4 1966171168
        %v375 = vunpack.c.0.s8 %v374
        %v376 = vlaneseq
        %v377 = vshrl.u32 %v376, 7
        %v378 = vsub.s32 %v375, %v377
        %v379 = vrot.slane %v372, %v378
        %v381 = vunpack.c.l.s4 1966171168
        %v382 = vunpack.c.0.s8 %v381
        %v383 = vlaneseq
        %v384 = vshrl.u32 %v383, 7
        %v385 = vsub.s32 %v382, %v384
        %v386 = vrot.slane %v379, %v385
        %v388 = vadd.f32 %v369, %v386
        %v389 = vlaneseq
        %vm390 = vcmp.ge.s32.totalorder %v389, 0
        %vm391 = vcmp.lt.s32.totalorder %v389, 256
        %vm392 = vmand %vm390, %vm391
        %393 = vst.msk [vmem:[%s244] sm:$0x3] %vm392, %v388
        %s394 = sand.u32 %s119, 1
        %s395 = scalar_lea.sflag [#allocation4], %s394
        %s396 = sand.u32 %s119, 1
        %s397 = smul.addr %s396, 2
        %s398 = scalar_lea.vmem [#allocation7], %s397
        // Predicated region
        $region41: #{tpu_custom_call.1} parent=27 // pred_check
          %p399 = pneg %p129
        $region42: #{tpu_custom_call.1} parent=27 // pred_check_branch
          %401 = sbr.rel (%p399) target = $region44
        $region43: #{tpu_custom_call.1} parent=27 // pred_region
          %s403 = ssub.s32 32, 32
          %404 = vsyncadd %s395, %s403
          %s405 = smul.addr %s28, 2
          %s406 = smul.addr %s27, 2
          %s407 = sadd.s32 %s405, %s406
          %s408 = smul.addr %s407, 16
          %s409 = scalar_lea.hbm %s2, %s408
          %s411 = sshll.u32 %s398, 4
          %s412 = int_to_ptr.vmem [resolvable:$true] %s411
          %414 = dma.vmem_to_hbm [thread:$0]  %s412, 32, %s409, %s395
        $region44: #{tpu_custom_call.1} parent=27 // pred_fallthru
          _
      $region28: #{tpu_custom_call.1} parent=5 // pred_fallthru
        _
      %p415 = scmp.le.s32.totalorder 2, %s17
      // Predicated region
      $region45: #{tpu_custom_call.1} parent=5 // pred_check
        %p416 = pneg %p415
      $region46: #{tpu_custom_call.1} parent=5 // pred_check_branch
        %418 = sbr.rel (%p416) target = $region48
      $region47: #{tpu_custom_call.1} parent=5 // pred_region
        %s419 = ssub.s32 %s17, 2
        // Predicated region
        $region49: #{tpu_custom_call.1} parent=47 // pred_check
          %p420 = pneg %p135
        $region50: #{tpu_custom_call.1} parent=47 // pred_check_branch
          %422 = sbr.rel (%p420) target = $region52
        $region51: #{tpu_custom_call.1} parent=47 // pred_region
          %s423 = sand.u32 %s120, 1
          %s424 = scalar_lea.sflag [#allocation4], %s423
          %s425 = sand.u32 %s120, 1
          %s426 = smul.addr %s425, 2
          %s427 = scalar_lea.vmem [#allocation7], %s426
          %428 = dma.done %s424, 32
        $region52: #{tpu_custom_call.1} parent=47 // pred_fallthru
          _
      $region48: #{tpu_custom_call.1} parent=5 // pred_fallthru
        _
    $region6: #{tpu_custom_call.1} parent=1 // loop_footer
      %s21 = sadd.s32 1, %s17
    $region7: #{tpu_custom_call.1} parent=1 // loop_footer_branch
      %16 = sbr.rel target = $region3
    $region8: #{tpu_custom_call.1} parent=1 // loop_exit
      _
    %429 = vsyncpa [#allocation3], 1
    %s430 = scalar_lea.sflag [#allocation3], 1
    %431 = vsyncpa %s430, 1
    %432 = vsyncpa [#allocation6], 1
    %s433 = scalar_lea.sflag [#allocation6], 1
    %434 = vsyncpa %s433, 1
    %435 = vsyncpa [#allocation4], 1
    %s436 = scalar_lea.sflag [#allocation4], 1
    %437 = vsyncpa %s436, 1

</llo_original>
